<compile_context>
chip_gen: v7x
topology: tpu7x:2x2x1
jax: 0.10.0
libtpu: 0.0.40
codegen_flags: <defaults>
</compile_context>

<pallas_src>
import functools

import jax
import jax.numpy as jnp
from jax import lax
from jax.experimental import pallas as pl
from jax.experimental.pallas import tpu as pltpu

_EPS = 1e-8  # torch.cosine_similarity default eps


def _cos_loss_kernel(gt_ref, pre_ref, seg_ref, out_ref, *,
                     n_groups, group_size, m_total):
    """One M-tile: per-row cosine terms via one pass of sums-of-products."""
    i = pl.program_id(0)
    tm = gt_ref.shape[0]

    # Cast after the DMA (halves HBM traffic for bf16 callers; v5e-safe).
    x = gt_ref[...].astype(jnp.float32)   # (tm, L) lane-dense
    y = pre_ref[...].astype(jnp.float32)  # (tm, L)

    # Whole-row (flattened N*A) sums of products — VPU multiply + XLU reduce.
    sxy = jnp.sum(x * y, axis=1, keepdims=True)  # (tm, 1)
    sxx = jnp.sum(x * x, axis=1, keepdims=True)
    syy = jnp.sum(y * y, axis=1, keepdims=True)

    # Per-(row, group) sums Σ_a x for the centering correction.
    if n_groups == 1:
        gx = jnp.sum(x, axis=1, keepdims=True)   # (tm, 1)
        gy = jnp.sum(y, axis=1, keepdims=True)
    else:
        s = seg_ref[...]                         # (L, n_groups) 0/1 segment matrix
        gx = jnp.dot(x, s, preferred_element_type=jnp.float32)  # (tm, n_groups)
        gy = jnp.dot(y, s, preferred_element_type=jnp.float32)

    # Σ(x-μx)(y-μy) = Σxy − (Σx)(Σy)/A   (per group, then summed over groups)
    inv_a = jnp.float32(1.0 / group_size)
    dot = sxy - inv_a * jnp.sum(gx * gy, axis=1, keepdims=True)  # (tm, 1)
    xx = sxx - inv_a * jnp.sum(gx * gx, axis=1, keepdims=True)
    yy = syy - inv_a * jnp.sum(gy * gy, axis=1, keepdims=True)

    # torch semantics: clamp each norm to eps separately.
    nx = jnp.maximum(jnp.sqrt(jnp.maximum(xx, 0.0)), _EPS)
    ny = jnp.maximum(jnp.sqrt(jnp.maximum(yy, 0.0)), _EPS)
    cos = dot / (nx * ny)                                        # (tm, 1)

    # Mask padded tail rows (zero-padded in the wrapper) out of the sum.
    row = lax.broadcasted_iota(jnp.int32, (tm, 1), 0) + i * tm
    valid = (row < m_total).astype(jnp.float32)
    partial = jnp.sum((1.0 - cos) * valid)                       # scalar

    # Store the per-tile partial into its own full (8, 128) output block
    # (unmasked lane-dense store; distinct memory tile per grid step so the
    # "parallel" grid axis is race-free).  Epilogue sums everything.
    r = lax.broadcasted_iota(jnp.int32, (8, 128), 0)
    c = lax.broadcasted_iota(jnp.int32, (8, 128), 1)
    out_ref[...] = jnp.where((r == 0) & (c == 0), partial, jnp.float32(0.0))


def cos_loss(gt, pre):
    """Pallas implementation of Cos_loss.forward. Accepts 2D or 3D inputs."""
    gt = jnp.asarray(gt)
    pre = jnp.asarray(pre)
    assert gt.shape == pre.shape

    if gt.ndim == 3:
        M, N, A = gt.shape
        n_groups, group_size = int(N), int(A)
        gt2 = gt.reshape(M, N * A)      # lane-dense flatten (free, row-major)
        pre2 = pre.reshape(M, N * A)
    elif gt.ndim == 2:
        M, N = gt.shape
        n_groups, group_size = 1, int(N)
        gt2, pre2 = gt, pre             # native (M, N): sublane- & lane-dense
    else:
        raise ValueError("Cos_loss expects a 2D or 3D input")

    M = int(M)
    L = n_groups * group_size
    itemsize = jnp.dtype(gt2.dtype).itemsize

    # Tile rows so 2 inputs x 2 pipeline buffers stay well under scoped VMEM on
    # every generation (v5e 16 MiB default, v7x 64 MiB physical).
    budget = 16 * 1024 * 1024
    tm = budget // max(1, 4 * L * itemsize)
    tm = int(max(8, min(512, (tm // 8) * 8)))
    m_pad8 = ((M + 7) // 8) * 8
    if m_pad8 <= tm:
        tm = m_pad8
    Mp = ((M + tm - 1) // tm) * tm
    grid_m = Mp // tm

    if Mp != M:  # zero rows -> cos = 0 (denominator clamped), masked out in-kernel
        gt2 = jnp.pad(gt2, ((0, Mp - M), (0, 0)))
        pre2 = jnp.pad(pre2, ((0, Mp - M), (0, 0)))

    # 0/1 segment-indicator matrix: per-(row, group) sums via one MXU matmul.
    seg = (jnp.arange(L, dtype=jnp.int32)[:, None] // group_size
           == jnp.arange(n_groups, dtype=jnp.int32)[None, :]).astype(jnp.float32)

    kernel = functools.partial(_cos_loss_kernel, n_groups=n_groups,
                               group_size=group_size, m_total=M)

    partials = pl.pallas_call(
        kernel,
        out_shape=jax.ShapeDtypeStruct((grid_m * 8, 128), jnp.float32),
        grid_spec=pltpu.PrefetchScalarGridSpec(
            num_scalar_prefetch=0,
            grid=(grid_m,),
            in_specs=[
                pl.BlockSpec((tm, L), lambda i: (i, 0)),
                pl.BlockSpec((tm, L), lambda i: (i, 0)),
                pl.BlockSpec((L, n_groups), lambda i: (0, 0)),  # constant block
            ],
            out_specs=pl.BlockSpec((8, 128), lambda i: (i, 0)),
        ),
        compiler_params=pltpu.CompilerParams(
            dimension_semantics=("parallel",),          # v7x: shard tiles over both TCs
            vmem_limit_bytes=32 * 1024 * 1024,
        ),
    )(gt2, pre2, seg)

    # Tiny JAX epilogue: finish the mean over M.
    return jnp.sum(partials) / jnp.float32(M)


def _cos_loss_ref(gt, pre):
    """Pure-JAX reference mirroring the PyTorch module, for verification."""
    gt = jnp.asarray(gt, jnp.float32)
    pre = jnp.asarray(pre, jnp.float32)
    if gt.ndim == 3:
        M, N, A = gt.shape
        gt = gt - jnp.mean(gt, axis=2, keepdims=True)
        pre = pre - jnp.mean(pre, axis=2, keepdims=True)
        gt = gt.reshape(M, -1)
        pre = pre.reshape(M, -1)
    else:
        gt = gt - jnp.mean(gt, axis=1, keepdims=True)
        pre = pre - jnp.mean(pre, axis=1, keepdims=True)
    nx = jnp.maximum(jnp.linalg.norm(gt, axis=1), _EPS)
    ny = jnp.maximum(jnp.linalg.norm(pre, axis=1), _EPS)
    cos = jnp.sum(gt * pre, axis=1) / (nx * ny)
    return jnp.mean(1.0 - cos)


if __name__ == "__main__":
    key = jax.random.PRNGKey(0)
    k1, k2, k3, k4, k5, k6 = jax.random.split(key, 6)

    # 3D case (M, N, A) — module's 3D branch.
    gt3 = jax.random.normal(k1, (2, 4, 16), jnp.float32)
    pre3 = jax.random.normal(k2, (2, 4, 16), jnp.float32)
    loss3 = jax.block_until_ready(cos_loss(gt3, pre3))
    ref3 = _cos_loss_ref(gt3, pre3)
    assert abs(float(loss3) - float(ref3)) < 5e-5, (loss3, ref3)

    # 2D case (M, N) — module's 2D branch, native 2D block (no size-1 sublane).
    gt2 = jax.random.normal(k3, (2, 32), jnp.float32)
    pre2 = jax.random.normal(k4, (2, 32), jnp.float32)
    loss2 = jax.block_until_ready(cos_loss(gt2, pre2))
    ref2 = _cos_loss_ref(gt2, pre2)
    assert abs(float(loss2) - float(ref2)) < 5e-5, (loss2, ref2)

    # Larger 3D case exercising the multi-tile pipelined grid + row masking.
    gt3b = jax.random.normal(k5, (1000, 4, 16), jnp.float32)
    pre3b = jax.random.normal(k6, (1000, 4, 16), jnp.float32)
    loss3b = jax.block_until_ready(cos_loss(gt3b, pre3b))
    ref3b = _cos_loss_ref(gt3b, pre3b)
    assert abs(float(loss3b) - float(ref3b)) < 5e-5, (loss3b, ref3b)

    print("KERNEL_OK")
</pallas_src>

<mosaic_0001>
module attributes {stable_mosaic.version = 11 : i64} {
  func.func @_cos_loss_kernel(%arg0: i32, %arg1: memref<8x64xf32, #tpu.memory_space<vmem>>, %arg2: memref<8x64xf32, #tpu.memory_space<vmem>>, %arg3: memref<64x4xf32, #tpu.memory_space<vmem>>, %arg4: memref<8x128xf32, #tpu.memory_space<vmem>>) attributes {dimension_semantics = [#tpu.dimension_semantics<parallel>], iteration_bounds = array<i64: 1>, scalar_prefetch = 0 : i64, scratch_operands = 0 : i64, tpu.core_type = #tpu.core_type<tc>, window_params = [{transform_indices = @transform_0, window_bounds = array<i64: 8, 64>}, {transform_indices = @transform_1, window_bounds = array<i64: 8, 64>}, {pipeline_mode = #tpu.pipeline_mode<synchronous>, transform_indices = @transform_2, window_bounds = array<i64: 64, 4>}, {transform_indices = @transform_3, window_bounds = array<i64: 8, 128>}]} {
    %c0 = arith.constant 0 : index
    %c0_0 = arith.constant 0 : index
    %0 = vector.load %arg1[%c0, %c0_0] : memref<8x64xf32, #tpu.memory_space<vmem>>, vector<8x64xf32>
    %c0_1 = arith.constant 0 : index
    %c0_2 = arith.constant 0 : index
    %1 = vector.load %arg2[%c0_1, %c0_2] : memref<8x64xf32, #tpu.memory_space<vmem>>, vector<8x64xf32>
    %2 = arith.mulf %0, %1 : vector<8x64xf32>
    %cst = arith.constant dense<0.000000e+00> : vector<8xf32>
    %3 = vector.multi_reduction <add>, %2, %cst [1] : vector<8x64xf32> to vector<8xf32>
    %4 = vector.shape_cast %3 : vector<8xf32> to vector<8x1xf32>
    %5 = arith.mulf %0, %0 : vector<8x64xf32>
    %cst_3 = arith.constant dense<0.000000e+00> : vector<8xf32>
    %6 = vector.multi_reduction <add>, %5, %cst_3 [1] : vector<8x64xf32> to vector<8xf32>
    %7 = vector.shape_cast %6 : vector<8xf32> to vector<8x1xf32>
    %8 = arith.mulf %1, %1 : vector<8x64xf32>
    %cst_4 = arith.constant dense<0.000000e+00> : vector<8xf32>
    %9 = vector.multi_reduction <add>, %8, %cst_4 [1] : vector<8x64xf32> to vector<8xf32>
    %10 = vector.shape_cast %9 : vector<8xf32> to vector<8x1xf32>
    %c0_5 = arith.constant 0 : index
    %c0_6 = arith.constant 0 : index
    %11 = vector.load %arg3[%c0_5, %c0_6] : memref<64x4xf32, #tpu.memory_space<vmem>>, vector<64x4xf32>
    %cst_7 = arith.constant dense<0.000000e+00> : vector<8x4xf32>
    %12 = tpu.matmul %0, %11, %cst_7 {dimension_numbers = #tpu.dot_dimension_numbers<[1], [0], [0], [1], [0, 0, 1, 1], [], []>} : vector<8x64xf32>, vector<64x4xf32>, vector<8x4xf32> -> vector<8x4xf32>
    %cst_8 = arith.constant dense<0.000000e+00> : vector<8x4xf32>
    %13 = tpu.matmul %1, %11, %cst_8 {dimension_numbers = #tpu.dot_dimension_numbers<[1], [0], [0], [1], [0, 0, 1, 1], [], []>} : vector<8x64xf32>, vector<64x4xf32>, vector<8x4xf32> -> vector<8x4xf32>
    %14 = arith.mulf %12, %13 : vector<8x4xf32>
    %cst_9 = arith.constant dense<0.000000e+00> : vector<8xf32>
    %15 = vector.multi_reduction <add>, %14, %cst_9 [1] : vector<8x4xf32> to vector<8xf32>
    %16 = vector.shape_cast %15 : vector<8xf32> to vector<8x1xf32>
    %cst_10 = arith.constant 6.250000e-02 : f32
    %17 = vector.broadcast %cst_10 : f32 to vector<8x1xf32>
    %18 = arith.mulf %17, %16 : vector<8x1xf32>
    %19 = arith.subf %4, %18 : vector<8x1xf32>
    %20 = arith.mulf %12, %12 : vector<8x4xf32>
    %cst_11 = arith.constant dense<0.000000e+00> : vector<8xf32>
    %21 = vector.multi_reduction <add>, %20, %cst_11 [1] : vector<8x4xf32> to vector<8xf32>
    %22 = vector.shape_cast %21 : vector<8xf32> to vector<8x1xf32>
    %cst_12 = arith.constant 6.250000e-02 : f32
    %23 = vector.broadcast %cst_12 : f32 to vector<8x1xf32>
    %24 = arith.mulf %23, %22 : vector<8x1xf32>
    %25 = arith.subf %7, %24 : vector<8x1xf32>
    %26 = arith.mulf %13, %13 : vector<8x4xf32>
    %cst_13 = arith.constant dense<0.000000e+00> : vector<8xf32>
    %27 = vector.multi_reduction <add>, %26, %cst_13 [1] : vector<8x4xf32> to vector<8xf32>
    %28 = vector.shape_cast %27 : vector<8xf32> to vector<8x1xf32>
    %cst_14 = arith.constant 6.250000e-02 : f32
    %29 = vector.broadcast %cst_14 : f32 to vector<8x1xf32>
    %30 = arith.mulf %29, %28 : vector<8x1xf32>
    %31 = arith.subf %10, %30 : vector<8x1xf32>
    %cst_15 = arith.constant 0.000000e+00 : f32
    %32 = vector.broadcast %cst_15 : f32 to vector<8x1xf32>
    %33 = arith.maximumf %25, %32 : vector<8x1xf32>
    %34 = math.sqrt %33 : vector<8x1xf32>
    %cst_16 = arith.constant 9.99999993E-9 : f32
    %35 = vector.broadcast %cst_16 : f32 to vector<8x1xf32>
    %36 = arith.maximumf %34, %35 : vector<8x1xf32>
    %cst_17 = arith.constant 0.000000e+00 : f32
    %37 = vector.broadcast %cst_17 : f32 to vector<8x1xf32>
    %38 = arith.maximumf %31, %37 : vector<8x1xf32>
    %39 = math.sqrt %38 : vector<8x1xf32>
    %cst_18 = arith.constant 9.99999993E-9 : f32
    %40 = vector.broadcast %cst_18 : f32 to vector<8x1xf32>
    %41 = arith.maximumf %39, %40 : vector<8x1xf32>
    %42 = arith.mulf %36, %41 : vector<8x1xf32>
    %43 = arith.divf %19, %42 : vector<8x1xf32>
    %44 = tpu.iota {dimensions = array<i32: 0>} : vector<8x1xi32>
    %c8_i32 = arith.constant 8 : i32
    %45 = arith.muli %arg0, %c8_i32 : i32
    %46 = vector.broadcast %45 : i32 to vector<8x1xi32>
    %47 = arith.addi %44, %46 : vector<8x1xi32>
    %c2_i32 = arith.constant 2 : i32
    %48 = vector.broadcast %c2_i32 : i32 to vector<8x1xi32>
    %49 = arith.cmpi slt, %47, %48 : vector<8x1xi32>
    %50 = arith.extui %49 : vector<8x1xi1> to vector<8x1xi32>
    %51 = arith.sitofp %50 : vector<8x1xi32> to vector<8x1xf32>
    %cst_19 = arith.constant 1.000000e+00 : f32
    %52 = vector.broadcast %cst_19 : f32 to vector<8x1xf32>
    %53 = arith.subf %52, %43 : vector<8x1xf32>
    %54 = arith.mulf %53, %51 : vector<8x1xf32>
    %55 = vector.shape_cast %54 : vector<8x1xf32> to vector<1x8x1xf32>
    %cst_20 = arith.constant dense<0.000000e+00> : vector<1xf32>
    %56 = vector.multi_reduction <add>, %55, %cst_20 [1, 2] : vector<1x8x1xf32> to vector<1xf32>
    %57 = vector.shape_cast %56 : vector<1xf32> to vector<1x1x1xf32>
    %58 = vector.extract %57[0, 0, 0] : f32 from vector<1x1x1xf32>
    %59 = tpu.iota {dimensions = array<i32: 0>} : vector<8x128xi32>
    %60 = tpu.iota {dimensions = array<i32: 1>} : vector<8x128xi32>
    %c0_i32 = arith.constant 0 : i32
    %61 = vector.broadcast %c0_i32 : i32 to vector<8x128xi32>
    %62 = arith.cmpi eq, %59, %61 : vector<8x128xi32>
    %c0_i32_21 = arith.constant 0 : i32
    %63 = vector.broadcast %c0_i32_21 : i32 to vector<8x128xi32>
    %64 = arith.cmpi eq, %60, %63 : vector<8x128xi32>
    %65 = arith.andi %62, %64 : vector<8x128xi1>
    %cst_22 = arith.constant 0.000000e+00 : f32
    %66 = vector.broadcast %58 : f32 to vector<8x128xf32>
    %67 = vector.broadcast %cst_22 : f32 to vector<8x128xf32>
    %68 = arith.select %65, %66, %67 : vector<8x128xi1>, vector<8x128xf32>
    %c0_23 = arith.constant 0 : index
    %c0_24 = arith.constant 0 : index
    %69 = vector.load %arg4[%c0_23, %c0_24] : memref<8x128xf32, #tpu.memory_space<vmem>>, vector<8x128xf32>
    tpu.vector_store %arg4[%c0_23, %c0_24], %68 {strides = array<i32>} : memref<8x128xf32, #tpu.memory_space<vmem>>, vector<8x128xf32>,
    return
  }
  func.func @transform_0(%arg0: i32) -> (i32, i32) {
    %c0_i32 = arith.constant 0 : i32
    %c0_i32_0 = arith.constant 0 : i32
    return %arg0, %c0_i32 : i32, i32
  }
  func.func @transform_1(%arg0: i32) -> (i32, i32) {
    %c0_i32 = arith.constant 0 : i32
    %c0_i32_0 = arith.constant 0 : i32
    return %arg0, %c0_i32 : i32, i32
  }
  func.func @transform_2(%arg0: i32) -> (i32, i32) {
    %c0_i32 = arith.constant 0 : i32
    %c0_i32_0 = arith.constant 0 : i32
    %c0_i32_1 = arith.constant 0 : i32
    return %c0_i32, %c0_i32_0 : i32, i32
  }
  func.func @transform_3(%arg0: i32) -> (i32, i32) {
    %c0_i32 = arith.constant 0 : i32
    %c0_i32_0 = arith.constant 0 : i32
    return %arg0, %c0_i32 : i32, i32
  }
}

</mosaic_0001>

<llo_original>
// kernel: tpu_custom_call.1
$region0: #{tpu_custom_call.1}
  #allocation0 [shape = 'u32[]', space=smem, size = 0x4, offset = 0x4, fixed_abs, tag = 'smem constant byte address 0x4 - core index']
  #allocation1 [shape = 'u32[144,128]{1,0:T(1,128)}', space=vmem, size = 0x12000, scoped, tag = 'internal scratch']
  %s0 = inlined_call_operand.vmem [shape: f32[8,64], index: 0, kind: input, shape index: {}]
  %s1 = inlined_call_operand.vmem [shape: f32[8,64], index: 1, kind: input, shape index: {}]
  %s2 = inlined_call_operand.vmem [shape: f32[64,4], index: 2, kind: input, shape index: {}]
  %s3 = inlined_call_operand.hbm [shape: f32[8,128], index: 3, kind: output, shape index: {}]
  %s4 = sld [smem:[#allocation0]]
  $region22: #{tpu_custom_call.1} parent=0
    _
  %s6 = ssub.s32 1, %s4
  %s7 = scalar_select 0, %s6, %s4
  $region1: #{tpu_custom_call.1} parent=0
    #allocation2 [shape = 'u8[4096]{0}', space=vmem, size = 0x1000, scoped, tag = 'output window, operand 0, single buffered']
    #allocation3 [shape = 's32[1]{0}', space=sflag, size = 0x4, scoped, tag = 'scoped memory for tpu_custom_call.1']
    %8 = vsyncpa [#allocation3], 0
    // Predicated region
    $region2: #{tpu_custom_call.1} parent=1 // pred_check
      _
    $region3: #{tpu_custom_call.1} parent=1 // pred_check_branch
      %10 = sbr.rel (0) target = $region5
    $region4: #{tpu_custom_call.1} parent=1 // pred_region
      _
    $region5: #{tpu_custom_call.1} parent=1 // pred_fallthru
      _
    // Predicated region
    $region6: #{tpu_custom_call.1} parent=1 // pred_check
      _
    $region7: #{tpu_custom_call.1} parent=1 // pred_check_branch
      %12 = sbr.rel (0) target = $region9
    $region8: #{tpu_custom_call.1} parent=1 // pred_region
      _
    $region9: #{tpu_custom_call.1} parent=1 // pred_fallthru
      _
    // Predicated region
    $region10: #{tpu_custom_call.1} parent=1 // pred_check
      _
    $region11: #{tpu_custom_call.1} parent=1 // pred_check_branch
      %14 = sbr.rel (0) target = $region13
    $region12: #{tpu_custom_call.1} parent=1 // pred_region
      _
    $region13: #{tpu_custom_call.1} parent=1 // pred_fallthru
      _
    %v15 = vld [vmem:[%s0] sm:$0xff]
    %v16 = vld [vmem:[%s1] sm:$0xff]
    %v17 = vmul.f32 %v15, %v16
    %vm18 = vcmask 523264
    %v19 = vsel %vm18, %v17, 0.0
    %20 = vadd.xlane.f32.xlu0 %v19
    %v21 = vpop.xlane.xlu0 %20
    %v22 = vmul.f32 %v15, %v15
    %v23 = vsel %vm18, %v22, 0.0
    %24 = vadd.xlane.f32.xlu0 %v23
    %v25 = vpop.xlane.xlu0 %24
    %v26 = vmul.f32 %v16, %v16
    %v27 = vsel %vm18, %v26, 0.0
    %28 = vadd.xlane.f32.xlu0 %v27
    %v29 = vpop.xlane.xlu0 %28
    %v30 = vld [vmem:[%s2] sm:$0xff]
    %v31 = vld [vmem:[%s2 + $0x8] sm:$0xff]
    %v32 = vld [vmem:[%s2 + $0x10] sm:$0xff]
    %v33 = vld [vmem:[%s2 + $0x18] sm:$0xff]
    %v34 = vld [vmem:[%s2 + $0x20] sm:$0xff]
    %v35 = vld [vmem:[%s2 + $0x28] sm:$0xff]
    %v36 = vld [vmem:[%s2 + $0x30] sm:$0xff]
    %v37 = vld [vmem:[%s2 + $0x38] sm:$0xff]
    %v39 = vsel %vm18, %v15, 0
    %41 = vmatprep.subr.mxu0 0.0
    %42 = vmatpush1.msra.mxu0 %v30
    %43 = vmatprep.subr.mxu0 0.0
    %44 = vmatpush1.msra.mxu0 %v31
    %45 = vmatprep.subr.mxu0 0.0
    %46 = vmatpush1.msra.mxu0 %v32
    %47 = vmatprep.subr.mxu0 0.0
    %48 = vmatpush1.msra.mxu0 %v33
    %49 = vmatprep.subr.mxu0 0.0
    %50 = vmatpush1.msra.mxu0 %v34
    %51 = vmatprep.subr.mxu0 0.0
    %52 = vmatpush1.msra.mxu0 %v35
    %53 = vmatprep.subr.mxu0 0.0
    %54 = vmatpush1.msra.mxu0 %v36
    %55 = vmatprep.subr.mxu0 0.0
    %56 = vmatpush1.msra.mxu0 %v37
    %57 = vmatprep.subr.mxu0 0.0
    %58 = vmatpush1.msra.mxu0 0.0
    %59 = vmatprep.subr.mxu0 0.0
    %60 = vmatpush1.msra.mxu0 0.0
    %61 = vmatprep.subr.mxu0 0.0
    %62 = vmatpush1.msra.mxu0 0.0
    %63 = vmatprep.subr.mxu0 0.0
    %64 = vmatpush1.msra.mxu0 0.0
    %65 = vmatprep.subr.mxu0 0.0
    %66 = vmatpush1.msra.mxu0 0.0
    %67 = vmatprep.subr.mxu0 0.0
    %68 = vmatpush1.msra.mxu0 0.0
    %69 = vmatprep.subr.mxu0 0.0
    %70 = vmatpush1.msra.mxu0 0.0
    %71 = vmatprep.subr.mxu0 0.0
    %72 = vmatpush1.msra.mxu0 0.0
    %73 = vmatprep.subr.mxu0 0.0
    %74 = vmatpush1.msra.mxu0 0.0
    %75 = vmatprep.subr.mxu0 0.0
    %76 = vmatpush1.msra.mxu0 0.0
    %77 = vmatprep.subr.mxu0 0.0
    %78 = vmatpush1.msra.mxu0 0.0
    %79 = vmatprep.subr.mxu0 0.0
    %80 = vmatpush1.msra.mxu0 0.0
    %81 = vmatprep.subr.mxu0 0.0
    %82 = vmatpush1.msra.mxu0 0.0
    %83 = vmatprep.subr.mxu0 0.0
    %84 = vmatpush1.msra.mxu0 0.0
    %85 = vmatprep.subr.mxu0 0.0
    %86 = vmatpush1.msra.mxu0 0.0
    %87 = vmatprep.subr.mxu0 0.0
    %88 = vmatpush1.msra.mxu0 0.0
    %89 = vmatprep.subr.mxu0 0.0
    %90 = vmatpush1.msra.mxu0 0.0
    %91 = vmatprep.subr.mxu0 0.0
    %92 = vmatpush1.msra.mxu0 0.0
    %93 = vmatprep.subr.mxu0 0.0
    %94 = vmatpush1.msra.mxu0 0.0
    %95 = vmatprep.subr.mxu0 0.0
    %96 = vmatpush1.msra.mxu0 0.0
    %97 = vmatprep.subr.mxu0 0.0
    %98 = vmatpush1.msra.mxu0 0.0
    %99 = vmatprep.subr.mxu0 0.0
    %100 = vmatpush1.msra.mxu0 0.0
    %101 = vmatprep.subr.mxu0 0.0
    %102 = vmatpush1.msra.mxu0 0.0
    %103 = vmatprep.subr.mxu0 0.0
    %104 = vmatpush1.msra.mxu0 0.0
    %105 = vmatprep.mubr.f32.mxu0 0.0
    %106 = vmatmul.mubr.f32.gmra.mrb[0].mxu0 %v39
    %v107 = vpop.f32.mrb[0].mxu0
    %v108 = vadd.f32 0.0, %v107
    %v109 = vpop.f32.mrb[0].mxu0
    %110 = vdwg.mxu0
    %v112 = vsel %vm18, %v16, 0
    %114 = vmatprep.subr.mxu0 0.0
    %115 = vmatpush1.msra.mxu0 %v30
    %116 = vmatprep.subr.mxu0 0.0
    %117 = vmatpush1.msra.mxu0 %v31
    %118 = vmatprep.subr.mxu0 0.0
    %119 = vmatpush1.msra.mxu0 %v32
    %120 = vmatprep.subr.mxu0 0.0
    %121 = vmatpush1.msra.mxu0 %v33
    %122 = vmatprep.subr.mxu0 0.0
    %123 = vmatpush1.msra.mxu0 %v34
    %124 = vmatprep.subr.mxu0 0.0
    %125 = vmatpush1.msra.mxu0 %v35
    %126 = vmatprep.subr.mxu0 0.0
    %127 = vmatpush1.msra.mxu0 %v36
    %128 = vmatprep.subr.mxu0 0.0
    %129 = vmatpush1.msra.mxu0 %v37
    %130 = vmatprep.subr.mxu0 0.0
    %131 = vmatpush1.msra.mxu0 0.0
    %132 = vmatprep.subr.mxu0 0.0
    %133 = vmatpush1.msra.mxu0 0.0
    %134 = vmatprep.subr.mxu0 0.0
    %135 = vmatpush1.msra.mxu0 0.0
    %136 = vmatprep.subr.mxu0 0.0
    %137 = vmatpush1.msra.mxu0 0.0
    %138 = vmatprep.subr.mxu0 0.0
    %139 = vmatpush1.msra.mxu0 0.0
    %140 = vmatprep.subr.mxu0 0.0
    %141 = vmatpush1.msra.mxu0 0.0
    %142 = vmatprep.subr.mxu0 0.0
    %143 = vmatpush1.msra.mxu0 0.0
    %144 = vmatprep.subr.mxu0 0.0
    %145 = vmatpush1.msra.mxu0 0.0
    %146 = vmatprep.subr.mxu0 0.0
    %147 = vmatpush1.msra.mxu0 0.0
    %148 = vmatprep.subr.mxu0 0.0
    %149 = vmatpush1.msra.mxu0 0.0
    %150 = vmatprep.subr.mxu0 0.0
    %151 = vmatpush1.msra.mxu0 0.0
    %152 = vmatprep.subr.mxu0 0.0
    %153 = vmatpush1.msra.mxu0 0.0
    %154 = vmatprep.subr.mxu0 0.0
    %155 = vmatpush1.msra.mxu0 0.0
    %156 = vmatprep.subr.mxu0 0.0
    %157 = vmatpush1.msra.mxu0 0.0
    %158 = vmatprep.subr.mxu0 0.0
    %159 = vmatpush1.msra.mxu0 0.0
    %160 = vmatprep.subr.mxu0 0.0
    %161 = vmatpush1.msra.mxu0 0.0
    %162 = vmatprep.subr.mxu0 0.0
    %163 = vmatpush1.msra.mxu0 0.0
    %164 = vmatprep.subr.mxu0 0.0
    %165 = vmatpush1.msra.mxu0 0.0
    %166 = vmatprep.subr.mxu0 0.0
    %167 = vmatpush1.msra.mxu0 0.0
    %168 = vmatprep.subr.mxu0 0.0
    %169 = vmatpush1.msra.mxu0 0.0
    %170 = vmatprep.subr.mxu0 0.0
    %171 = vmatpush1.msra.mxu0 0.0
    %172 = vmatprep.subr.mxu0 0.0
    %173 = vmatpush1.msra.mxu0 0.0
    %174 = vmatprep.subr.mxu0 0.0
    %175 = vmatpush1.msra.mxu0 0.0
    %176 = vmatprep.subr.mxu0 0.0
    %177 = vmatpush1.msra.mxu0 0.0
    %178 = vmatprep.mubr.f32.mxu0 0.0
    %179 = vmatmul.mubr.f32.gmra.mrb[0].mxu0 %v112
    %v180 = vpop.f32.mrb[0].mxu0
    %v181 = vadd.f32 0.0, %v180
    %v182 = vpop.f32.mrb[0].mxu0
    %183 = vdwg.mxu0
    %v184 = vmul.f32 %v108, %v181
    %vm185 = vcmask 31744
    %v186 = vsel %vm185, %v184, 0.0
    %187 = vadd.xlane.f32.xlu0 %v186
    %v188 = vpop.xlane.xlu0 %187
    %v189 = vmul.f32 %v188, 0.0625
    %v190 = vsub.f32 %v21, %v189
    %v191 = vmul.f32 %v108, %v108
    %v192 = vsel %vm185, %v191, 0.0
    %193 = vadd.xlane.f32.xlu0 %v192
    %v194 = vpop.xlane.xlu0 %193
    %v195 = vmul.f32 %v194, 0.0625
    %v196 = vsub.f32 %v25, %v195
    %v197 = vmul.f32 %v181, %v181
    %v198 = vsel %vm185, %v197, 0.0
    %199 = vadd.xlane.f32.xlu0 %v198
    %v200 = vpop.xlane.xlu0 %199
    %v201 = vmul.f32 %v200, 0.0625
    %v202 = vsub.f32 %v29, %v201
    %v203 = vmax.f32 %v196, 0.0
    %v204 = vrsqrt.pop %v203
    %v205 = vmul.f32 %v203, %v204
    %vm206 = vcmp.eq.f32.partialorder %v203, inf
    %v207 = vsel %vm206, %v203, %v205
    %vm208 = vcmp.eq.f32.partialorder %v203, 0.0
    %v209 = vand.u32 %v203, 2147483648
    %v210 = vsel %vm208, %v209, %v207
    %v211 = vmax.f32 %v210, 1e-08
    %v212 = vmax.f32 %v202, 0.0
    %v213 = vrsqrt.pop %v212
    %v214 = vmul.f32 %v212, %v213
    %vm215 = vcmp.eq.f32.partialorder %v212, inf
    %v216 = vsel %vm215, %v212, %v214
    %vm217 = vcmp.eq.f32.partialorder %v212, 0.0
    %v218 = vand.u32 %v212, 2147483648
    %v219 = vsel %vm217, %v218, %v216
    %v220 = vmax.f32 %v219, 1e-08
    %v221 = vmul.f32 %v211, %v220
    %v222 = vrcp.pop %v221
    %v223 = vmul.f32 %v190, %v222
    %v224 = vlaneseq
    %v225 = vshrl.u32 %v224, 7
    %s226 = smul.u32 0, 8
    %v227 = vstv %s226
    %v228 = vadd.s32 %v225, %v227
    %vm229 = vcmp.lt.s32.totalorder %v228, 2
    %v230 = vsel %vm229, 1, 0
    %v231 = vcvt.s32.f32 %v230
    %v232 = vsub.f32 1.0, %v223
    %v233 = vmul.f32 %v232, %v231
    %vm234 = vcmask 7168
    %v235 = vsel %vm234, %v233, 0.0
    %236 = vadd.xlane.f32.xlu0 %v235
    %v237 = vpop.xlane.xlu0 %236
    %v238 = vrot.slane %v237, 4
    %v239 = vadd.f32 %v237, %v238
    %v240 = vrot.slane %v239, 2
    %v241 = vadd.f32 %v239, %v240
    %v242 = vrot.slane %v241, 1
    %v243 = vadd.f32 %v241, %v242
    %s244 = vtos %v243
    %v245 = vlaneseq
    %v246 = vand.u32 %v245, 127
    %vm247 = vcmp.eq.s32.totalorder %v225, 0
    %vm248 = vcmp.eq.s32.totalorder %v246, 0
    %vm249 = vmand %vm247, %vm248
    %v250 = vstv %s244
    %v251 = vsel %vm249, %v250, 0.0
    %252 = vst [vmem:[#allocation2] sm:$0xff] %v251
    // Predicated region
    $region14: #{tpu_custom_call.1} parent=1 // pred_check
      _
    $region15: #{tpu_custom_call.1} parent=1 // pred_check_branch
      %254 = sbr.rel (0) target = $region17
    $region16: #{tpu_custom_call.1} parent=1 // pred_region
      %s256 = ssub.s32 128, 128
      %257 = vsyncadd [#allocation3], %s256
      %s259 = sshll.u32 [#allocation2], 4
      %s260 = int_to_ptr.vmem [resolvable:$true] %s259
      %262 = dma.vmem_to_hbm [thread:$0]  %s260, 128, %s3, [#allocation3]
    $region17: #{tpu_custom_call.1} parent=1 // pred_fallthru
      _
    // Predicated region
    $region18: #{tpu_custom_call.1} parent=1 // pred_check
      _
    $region19: #{tpu_custom_call.1} parent=1 // pred_check_branch
      %264 = sbr.rel (0) target = $region21
    $region20: #{tpu_custom_call.1} parent=1 // pred_region
      %265 = dma.done [#allocation3], 128
    $region21: #{tpu_custom_call.1} parent=1 // pred_fallthru
      _
    %266 = vsyncpa [#allocation3], 1

</llo_original>
